<compile_context>
chip_gen: v5e
topology: v5e:2x2
jax: 0.10.0
libtpu: 0.0.40
codegen_flags: <defaults>
</compile_context>

<pallas_src>
import functools

import jax
import jax.numpy as jnp
from jax.experimental import pallas as pl
from jax.experimental.pallas import tpu as pltpu


def _gcn_dense_kernel(x_ref, adj_ref, w1_ref, b1_ref, w2_ref, b2_ref, out_ref,
                      *, aggregate_first):
    """One graph per grid step; all operands resident in VMEM.

    Padded shapes:
      x_ref   [Np, Fp] bf16     adj_ref [Np, Np] bf16
      w1_ref  [Fp, Hp] bf16     b1_ref  [1, Hp]  f32
      w2_ref  [Hp, Hp] bf16     b2_ref  [1, Hp]  f32
      out_ref [Np, Hp] f32  (Hp multiple of 128 -> lane-dense store)
    """
    adj = adj_ref[...]            # loaded once, reused by both layers
    x = x_ref[...]

    # ---- layer 1: gc1 + ReLU (bf16 operands, f32 accumulation) -------------
    if aggregate_first:
        # (adj @ x) @ W1 : the N^2 matmul contracts over the (smaller) feature dim.
        ax = jnp.dot(adj, x, preferred_element_type=jnp.float32).astype(jnp.bfloat16)
        h1 = jnp.dot(ax, w1_ref[...], preferred_element_type=jnp.float32) + b1_ref[...]
    else:
        s1 = jnp.dot(x, w1_ref[...], preferred_element_type=jnp.float32).astype(jnp.bfloat16)
        h1 = jnp.dot(adj, s1, preferred_element_type=jnp.float32) + b1_ref[...]
    h1 = jnp.maximum(h1, 0.0).astype(jnp.bfloat16)

    # dropout(h1): eval-mode identity.
    # TODO(synk): training-mode dropout (Bernoulli mask via pltpu.prng_*) not modeled.

    # ---- layer 2: gc2 -------------------------------------------------------
    s2 = jnp.dot(h1, w2_ref[...], preferred_element_type=jnp.float32).astype(jnp.bfloat16)
    out_ref[...] = (jnp.dot(adj, s2, preferred_element_type=jnp.float32)
                    + b2_ref[...])                     # single lane-dense f32 store


def _round_up(v, m):
    return ((v + m - 1) // m) * m


def _modulate(weight, bias, w_mod, b_mod):
    # w_mod and b_mod are handled independently (robustness fix vs the reference,
    # which assumes both-or-neither).
    if w_mod is not None:
        weight = weight * (1.0 + w_mod[0]) + w_mod[1]
    if b_mod is not None:
        bias = bias * (1.0 + b_mod[0]) + b_mod[1]
    return weight, bias


def gcn_dense_forward_batched(x, adj, params, w1=None, b1=None, w2=None, b2=None):
    """Batched GCN_dense.forward over B independent graphs (eval mode).

    x: [B, N, nfeat], adj: [B, N, N]  ->  [B, N, nhid] float32.
    """
    B, N, fin = x.shape
    nhid = params["w2"].shape[1]

    ew1, eb1 = _modulate(params["w1"], params["b1"], w1, b1)
    ew2, eb2 = _modulate(params["w2"], params["b2"], w2, b2)
    eb1 = jnp.asarray(eb1, jnp.float32).reshape(1, -1)
    eb2 = jnp.asarray(eb2, jnp.float32).reshape(1, -1)

    # Pad lane dims (features / hidden) to 128 and the node dim to 16
    # (bf16 sublane packing). Zero padding keeps the math exact; padded
    # rows/cols are sliced off at the end.
    np_ = _round_up(N, 16)
    fp = _round_up(fin, 128)
    hp = _round_up(nhid, 128)

    xp = jnp.zeros((B, np_, fp), jnp.bfloat16).at[:, :N, :fin].set(x.astype(jnp.bfloat16))
    ap = jnp.zeros((B, np_, np_), jnp.bfloat16).at[:, :N, :N].set(adj.astype(jnp.bfloat16))
    w1p = jnp.zeros((fp, hp), jnp.bfloat16).at[:fin, :nhid].set(ew1.astype(jnp.bfloat16))
    w2p = jnp.zeros((hp, hp), jnp.bfloat16).at[:nhid, :nhid].set(ew2.astype(jnp.bfloat16))
    b1p = jnp.zeros((1, hp), jnp.float32).at[:, :nhid].set(eb1)
    b2p = jnp.zeros((1, hp), jnp.float32).at[:, :nhid].set(eb2)

    aggregate_first = fp <= hp

    # Advisory cost estimate: 4 matmuls per graph.
    k1 = fp if aggregate_first else hp
    flops = 2 * B * (np_ * np_ * k1 + np_ * fp * hp + np_ * hp * hp + np_ * np_ * hp)
    bytes_accessed = (2 * (xp.size + ap.size + w1p.size + w2p.size)      # bf16 inputs
                      + 4 * (b1p.size + b2p.size)                        # f32 biases
                      + 4 * B * np_ * hp)                                # f32 output

    # Double-buffered per-graph blocks + resident weights/biases (bytes).
    per_graph = 2 * (np_ * fp + np_ * np_) + 4 * np_ * hp
    weights = 2 * (fp * hp + hp * hp) + 4 * 2 * hp
    vmem_limit = int(min(max(4 * per_graph + 2 * weights, 16 << 20), 48 << 20))

    out_p = pl.pallas_call(
        functools.partial(_gcn_dense_kernel, aggregate_first=aggregate_first),
        out_shape=jax.ShapeDtypeStruct((B, np_, hp), jnp.float32),
        grid_spec=pltpu.PrefetchScalarGridSpec(
            num_scalar_prefetch=0,
            grid=(B,),
            in_specs=[
                pl.BlockSpec((pl.Squeezed(), np_, fp), lambda b: (b, 0, 0)),
                pl.BlockSpec((pl.Squeezed(), np_, np_), lambda b: (b, 0, 0)),
                pl.BlockSpec((fp, hp), lambda b: (0, 0)),
                pl.BlockSpec((1, hp), lambda b: (0, 0)),
                pl.BlockSpec((hp, hp), lambda b: (0, 0)),
                pl.BlockSpec((1, hp), lambda b: (0, 0)),
            ],
            out_specs=pl.BlockSpec((pl.Squeezed(), np_, hp), lambda b: (b, 0, 0)),
        ),
        compiler_params=pltpu.CompilerParams(
            dimension_semantics=("parallel",),
            vmem_limit_bytes=vmem_limit,
        ),
        cost_estimate=pl.CostEstimate(
            flops=int(flops), transcendentals=0, bytes_accessed=int(bytes_accessed)),
    )(xp, ap, w1p, b1p, w2p, b2p)

    # TODO(synk): once a single [N, N] bf16 adj block no longer fits VMEM
    # (~N > 4k on v7x's 64 MiB), switch to a row-tiled two-pass design
    # (layer-1 pass materializing h1 in HBM, layer-2 pass consuming it).
    return out_p[:, :N, :nhid]


def gcn_dense_forward(x, adj, params, w1=None, b1=None, w2=None, b2=None):
    """Single-graph forward matching GCN_dense.forward(x, adj, w1, b1, w2, b2)."""
    return gcn_dense_forward_batched(x[None], adj[None], params, w1, b1, w2, b2)[0]


if __name__ == "__main__":
    N, nfeat, nhid, E, B = 16, 16, 32, 48, 4

    key = jax.random.PRNGKey(0)
    k = jax.random.split(key, 12)

    # Parameter init mirrors GraphConvolution_dense.reset_parameters:
    # uniform(-stdv, stdv) with stdv = 1/sqrt(out_features).
    def uinit(kk, shape, stdv):
        return jax.random.uniform(kk, shape, jnp.float32, -stdv, stdv)

    stdv = 1.0 / (nhid ** 0.5)
    params = {
        "w1": uinit(k[0], (nfeat, nhid), stdv),
        "b1": uinit(k[1], (1, nhid), stdv),     # kept 2-D for TPU-friendly broadcast
        "w2": uinit(k[2], (nhid, nhid), stdv),
        "b2": uinit(k[3], (1, nhid), stdv),
    }

    def make_graph(kx, ks, kd):
        xg = jax.random.normal(kx, (N, nfeat), jnp.float32)
        src = jax.random.randint(ks, (E,), 0, N)
        dst = jax.random.randint(kd, (E,), 0, N)
        ag = jnp.zeros((N, N), jnp.float32).at[dst, src].set(1.0)
        ag = ag.at[jnp.arange(N), jnp.arange(N)].set(1.0)
        return xg, ag

    def ref_forward(xg, ag, rw1, rb1, rw2, rb2):
        h1 = jnp.maximum(ag @ (xg @ rw1) + rb1, 0.0)
        return ag @ (h1 @ rw2) + rb2

    # bf16 operands with f32 accumulation -> compare to f32 reference loosely.
    TOL = dict(atol=5e-2, rtol=5e-2)

    # --- single graph, default path (w*/b* = None) ---------------------------
    x0, adj0 = make_graph(k[4], k[5], k[6])
    out = gcn_dense_forward(x0, adj0, params)
    jax.block_until_ready(out)
    ref = ref_forward(x0, adj0, params["w1"], params["b1"], params["w2"], params["b2"])
    assert out.shape == (N, nhid)
    assert jnp.allclose(out, ref, **TOL), float(jnp.max(jnp.abs(out - ref)))

    # --- single graph, fully modulated path ----------------------------------
    w1m = (jnp.float32(0.1), jnp.float32(0.01))
    b1m = (jnp.float32(-0.05), jnp.float32(0.02))
    w2m = (jnp.float32(0.2), jnp.float32(-0.01))
    b2m = (jnp.float32(0.0), jnp.float32(0.03))
    out_m = gcn_dense_forward(x0, adj0, params, w1=w1m, b1=b1m, w2=w2m, b2=b2m)
    jax.block_until_ready(out_m)
    ew1 = params["w1"] * (1.0 + w1m[0]) + w1m[1]
    eb1 = params["b1"] * (1.0 + b1m[0]) + b1m[1]
    ew2 = params["w2"] * (1.0 + w2m[0]) + w2m[1]
    eb2 = params["b2"] * (1.0 + b2m[0]) + b2m[1]
    ref_m = ref_forward(x0, adj0, ew1, eb1, ew2, eb2)
    assert jnp.allclose(out_m, ref_m, **TOL), float(jnp.max(jnp.abs(out_m - ref_m)))

    # --- weights-only modulation (b=None) must not raise (robustness fix) ----
    out_w = gcn_dense_forward(x0, adj0, params, w1=w1m, w2=w2m)
    jax.block_until_ready(out_w)
    ref_w = ref_forward(x0, adj0, ew1, params["b1"], ew2, params["b2"])
    assert jnp.allclose(out_w, ref_w, **TOL), float(jnp.max(jnp.abs(out_w - ref_w)))

    # --- batched path: B graphs through one grid-parallel pallas_call --------
    xs, adjs = [], []
    for i in range(B):
        kk = jax.random.split(k[7 + i], 3)
        xi, ai = make_graph(kk[0], kk[1], kk[2])
        xs.append(xi)
        adjs.append(ai)
    xb, adjb = jnp.stack(xs), jnp.stack(adjs)
    out_b = gcn_dense_forward_batched(xb, adjb, params)
    jax.block_until_ready(out_b)
    ref_b = jax.vmap(lambda xx, aa: ref_forward(
        xx, aa, params["w1"], params["b1"], params["w2"], params["b2"]))(xb, adjb)
    assert out_b.shape == (B, N, nhid)
    assert jnp.allclose(out_b, ref_b, **TOL), float(jnp.max(jnp.abs(out_b - ref_b)))

    print("KERNEL_OK")
</pallas_src>

<mosaic_0001>
module attributes {stable_mosaic.version = 11 : i64} {
  func.func @_gcn_dense_kernel(%arg0: i32, %arg1: memref<1x16x128xbf16, #tpu.memory_space<vmem>>, %arg2: memref<1x16x16xbf16, #tpu.memory_space<vmem>>, %arg3: memref<128x128xbf16, #tpu.memory_space<vmem>>, %arg4: memref<1x128xf32, #tpu.memory_space<vmem>>, %arg5: memref<128x128xbf16, #tpu.memory_space<vmem>>, %arg6: memref<1x128xf32, #tpu.memory_space<vmem>>, %arg7: memref<1x16x128xf32, #tpu.memory_space<vmem>>) attributes {dimension_semantics = [#tpu.dimension_semantics<parallel>], iteration_bounds = array<i64: 1>, scalar_prefetch = 0 : i64, scratch_operands = 0 : i64, tpu.core_type = #tpu.core_type<tc>, window_params = [{transform_indices = @transform_0, window_bounds = array<i64: 1, 16, 128>}, {transform_indices = @transform_1, window_bounds = array<i64: 1, 16, 16>}, {pipeline_mode = #tpu.pipeline_mode<synchronous>, transform_indices = @transform_2, window_bounds = array<i64: 128, 128>}, {pipeline_mode = #tpu.pipeline_mode<synchronous>, transform_indices = @transform_3, window_bounds = array<i64: 1, 128>}, {pipeline_mode = #tpu.pipeline_mode<synchronous>, transform_indices = @transform_4, window_bounds = array<i64: 128, 128>}, {pipeline_mode = #tpu.pipeline_mode<synchronous>, transform_indices = @transform_5, window_bounds = array<i64: 1, 128>}, {transform_indices = @transform_6, window_bounds = array<i64: 1, 16, 128>}]} {
    %c0 = arith.constant 0 : index
    %c0_0 = arith.constant 0 : index
    %c0_1 = arith.constant 0 : index
    %0 = vector.load %arg2[%c0, %c0_0, %c0_1] : memref<1x16x16xbf16, #tpu.memory_space<vmem>>, vector<1x16x16xbf16>
    %1 = vector.shape_cast %0 : vector<1x16x16xbf16> to vector<16x16xbf16>
    %c0_2 = arith.constant 0 : index
    %c0_3 = arith.constant 0 : index
    %c0_4 = arith.constant 0 : index
    %2 = vector.load %arg1[%c0_2, %c0_3, %c0_4] : memref<1x16x128xbf16, #tpu.memory_space<vmem>>, vector<1x16x128xbf16>
    %3 = vector.shape_cast %2 : vector<1x16x128xbf16> to vector<16x128xbf16>
    %cst = arith.constant dense<0.000000e+00> : vector<16x128xf32>
    %4 = tpu.matmul %1, %3, %cst {dimension_numbers = #tpu.dot_dimension_numbers<[1], [0], [0], [1], [0, 0, 1, 1], [], []>} : vector<16x16xbf16>, vector<16x128xbf16>, vector<16x128xf32> -> vector<16x128xf32>
    %5 = arith.truncf %4 : vector<16x128xf32> to vector<16x128xbf16>
    %c0_5 = arith.constant 0 : index
    %c0_6 = arith.constant 0 : index
    %6 = vector.load %arg3[%c0_5, %c0_6] : memref<128x128xbf16, #tpu.memory_space<vmem>>, vector<128x128xbf16>
    %cst_7 = arith.constant dense<0.000000e+00> : vector<16x128xf32>
    %7 = tpu.matmul %5, %6, %cst_7 {dimension_numbers = #tpu.dot_dimension_numbers<[1], [0], [0], [1], [0, 0, 1, 1], [], []>} : vector<16x128xbf16>, vector<128x128xbf16>, vector<16x128xf32> -> vector<16x128xf32>
    %c0_8 = arith.constant 0 : index
    %c0_9 = arith.constant 0 : index
    %8 = vector.load %arg4[%c0_8, %c0_9] : memref<1x128xf32, #tpu.memory_space<vmem>>, vector<1x128xf32>
    %9 = vector.broadcast %8 : vector<1x128xf32> to vector<16x128xf32>
    %10 = arith.addf %7, %9 : vector<16x128xf32>
    %cst_10 = arith.constant 0.000000e+00 : f32
    %11 = vector.broadcast %cst_10 : f32 to vector<16x128xf32>
    %12 = arith.maximumf %10, %11 : vector<16x128xf32>
    %13 = arith.truncf %12 : vector<16x128xf32> to vector<16x128xbf16>
    %c0_11 = arith.constant 0 : index
    %c0_12 = arith.constant 0 : index
    %14 = vector.load %arg5[%c0_11, %c0_12] : memref<128x128xbf16, #tpu.memory_space<vmem>>, vector<128x128xbf16>
    %cst_13 = arith.constant dense<0.000000e+00> : vector<16x128xf32>
    %15 = tpu.matmul %13, %14, %cst_13 {dimension_numbers = #tpu.dot_dimension_numbers<[1], [0], [0], [1], [0, 0, 1, 1], [], []>} : vector<16x128xbf16>, vector<128x128xbf16>, vector<16x128xf32> -> vector<16x128xf32>
    %16 = arith.truncf %15 : vector<16x128xf32> to vector<16x128xbf16>
    %cst_14 = arith.constant dense<0.000000e+00> : vector<16x128xf32>
    %17 = tpu.matmul %1, %16, %cst_14 {dimension_numbers = #tpu.dot_dimension_numbers<[1], [0], [0], [1], [0, 0, 1, 1], [], []>} : vector<16x16xbf16>, vector<16x128xbf16>, vector<16x128xf32> -> vector<16x128xf32>
    %c0_15 = arith.constant 0 : index
    %c0_16 = arith.constant 0 : index
    %18 = vector.load %arg6[%c0_15, %c0_16] : memref<1x128xf32, #tpu.memory_space<vmem>>, vector<1x128xf32>
    %19 = vector.broadcast %18 : vector<1x128xf32> to vector<16x128xf32>
    %20 = arith.addf %17, %19 : vector<16x128xf32>
    %c0_17 = arith.constant 0 : index
    %c0_18 = arith.constant 0 : index
    %c0_19 = arith.constant 0 : index
    %21 = vector.load %arg7[%c0_17, %c0_18, %c0_19] : memref<1x16x128xf32, #tpu.memory_space<vmem>>, vector<1x16x128xf32>
    %22 = vector.shape_cast %21 : vector<1x16x128xf32> to vector<16x128xf32>
    %23 = vector.shape_cast %20 : vector<16x128xf32> to vector<1x16x128xf32>
    tpu.vector_store %arg7[%c0_17, %c0_18, %c0_19], %23 {strides = array<i32>} : memref<1x16x128xf32, #tpu.memory_space<vmem>>, vector<1x16x128xf32>,
    return
  }
  func.func @transform_0(%arg0: i32) -> (i32, i32, i32) {
    %c0_i32 = arith.constant 0 : i32
    %c0_i32_0 = arith.constant 0 : i32
    %c0_i32_1 = arith.constant 0 : i32
    return %arg0, %c0_i32, %c0_i32_0 : i32, i32, i32
  }
  func.func @transform_1(%arg0: i32) -> (i32, i32, i32) {
    %c0_i32 = arith.constant 0 : i32
    %c0_i32_0 = arith.constant 0 : i32
    %c0_i32_1 = arith.constant 0 : i32
    return %arg0, %c0_i32, %c0_i32_0 : i32, i32, i32
  }
  func.func @transform_2(%arg0: i32) -> (i32, i32) {
    %c0_i32 = arith.constant 0 : i32
    %c0_i32_0 = arith.constant 0 : i32
    %c0_i32_1 = arith.constant 0 : i32
    return %c0_i32, %c0_i32_0 : i32, i32
  }
  func.func @transform_3(%arg0: i32) -> (i32, i32) {
    %c0_i32 = arith.constant 0 : i32
    %c0_i32_0 = arith.constant 0 : i32
    %c0_i32_1 = arith.constant 0 : i32
    return %c0_i32, %c0_i32_0 : i32, i32
  }
  func.func @transform_4(%arg0: i32) -> (i32, i32) {
    %c0_i32 = arith.constant 0 : i32
    %c0_i32_0 = arith.constant 0 : i32
    %c0_i32_1 = arith.constant 0 : i32
    return %c0_i32, %c0_i32_0 : i32, i32
  }
  func.func @transform_5(%arg0: i32) -> (i32, i32) {
    %c0_i32 = arith.constant 0 : i32
    %c0_i32_0 = arith.constant 0 : i32
    %c0_i32_1 = arith.constant 0 : i32
    return %c0_i32, %c0_i32_0 : i32, i32
  }
  func.func @transform_6(%arg0: i32) -> (i32, i32, i32) {
    %c0_i32 = arith.constant 0 : i32
    %c0_i32_0 = arith.constant 0 : i32
    %c0_i32_1 = arith.constant 0 : i32
    return %arg0, %c0_i32, %c0_i32_0 : i32, i32, i32
  }
}

</mosaic_0001>

<llo_original>
// kernel: tpu_custom_call.1
$region0: #{tpu_custom_call.1}
  #allocation0 [shape = 'u32[]', space=smem, size = 0x4, offset = 0x4, fixed_abs, tag = 'smem constant byte address 0x4 - core index']
  #allocation1 [shape = 'u32[72,128]{1,0:T(1,128)}', space=vmem, size = 0x9000, scoped, tag = 'internal scratch']
  %s0 = inlined_call_operand.hbm [shape: bf16[1,16,128], index: 0, kind: input, shape index: {}]
  %s1 = inlined_call_operand.hbm [shape: bf16[1,16,16], index: 1, kind: input, shape index: {}]
  %s2 = inlined_call_operand.hbm [shape: bf16[128,128], index: 2, kind: input, shape index: {}]
  %s3 = inlined_call_operand.vmem [shape: f32[1,128], index: 3, kind: input, shape index: {}]
  %s4 = inlined_call_operand.hbm [shape: bf16[128,128], index: 4, kind: input, shape index: {}]
  %s5 = inlined_call_operand.vmem [shape: f32[1,128], index: 5, kind: input, shape index: {}]
  %s6 = inlined_call_operand.hbm [shape: f32[1,16,128], index: 6, kind: output, shape index: {}]
  %s7 = sld [smem:[#allocation0]]
  $region50: #{tpu_custom_call.1} parent=0
    _
  %s9 = ssub.s32 1, %s7
  %s10 = scalar_select 0, %s9, %s7
  $region1: #{tpu_custom_call.1} parent=0
    #allocation2 [shape = 'u8[4096]{0}', space=vmem, size = 0x1000, scoped, tag = 'input window, operand 0, single buffered']
    #allocation3 [shape = 's32[1]{0}', space=sflag, size = 0x4, scoped, tag = 'scoped memory for tpu_custom_call.1']
    #allocation4 [shape = 's32[1]{0}', space=sflag, size = 0x4, scoped, tag = 'scoped memory for tpu_custom_call.1']
    #allocation5 [shape = 'u8[4096]{0}', space=vmem, size = 0x1000, scoped, tag = 'input window, operand 1, single buffered']
    #allocation6 [shape = 's32[1]{0}', space=sflag, size = 0x4, scoped, tag = 'scoped memory for tpu_custom_call.1']
    #allocation7 [shape = 'u8[32768]{0}', space=vmem, size = 0x8000, scoped, tag = 'input window, operand 2, single buffered']
    #allocation8 [shape = 'u8[32768]{0}', space=vmem, size = 0x8000, scoped, tag = 'input window, operand 4, single buffered']
    #allocation9 [shape = 's32[1]{0}', space=sflag, size = 0x4, scoped, tag = 'scoped memory for tpu_custom_call.1']
    #allocation10 [shape = 'u8[8192]{0}', space=vmem, size = 0x2000, scoped, tag = 'output window, operand 0, single buffered']
    %11 = vsyncpa [#allocation3], 0
    %12 = vsyncpa [#allocation6], 0
    %13 = vsyncpa [#allocation9], 0
    %14 = vsyncpa [#allocation4], 0
    // Predicated region
    $region2: #{tpu_custom_call.1} parent=1 // pred_check
      _
    $region3: #{tpu_custom_call.1} parent=1 // pred_check_branch
      %16 = sbr.rel (0) target = $region5
    $region4: #{tpu_custom_call.1} parent=1 // pred_region
      %18 = vsyncadd [#allocation3], 0
      %s19 = sshll.u32 %s0, 4
      %s20 = int_to_ptr.hbm [resolvable:$true] %s19
      %s21 = sshll.u32 [#allocation2], 4
      %s22 = int_to_ptr.vmem [resolvable:$true] %s21
      %27 = dma.hbm_to_vmem [thread:$0]  %s20, 128, %s22, [#allocation3], 64, 64, 4
    $region5: #{tpu_custom_call.1} parent=1 // pred_fallthru
      _
    // Predicated region
    $region6: #{tpu_custom_call.1} parent=1 // pred_check
      _
    $region7: #{tpu_custom_call.1} parent=1 // pred_check_branch
      %29 = sbr.rel (0) target = $region9
    $region8: #{tpu_custom_call.1} parent=1 // pred_region
      %31 = vsyncadd [#allocation6], 0
      %s32 = sshll.u32 %s1, 4
      %s33 = int_to_ptr.hbm [resolvable:$true] %s32
      %s34 = sshll.u32 [#allocation5], 4
      %s35 = int_to_ptr.vmem [resolvable:$true] %s34
      %40 = dma.hbm_to_vmem [thread:$0]  %s33, 128, %s35, [#allocation6], 64, 64, 4
    $region9: #{tpu_custom_call.1} parent=1 // pred_fallthru
      _
    // Predicated region
    $region10: #{tpu_custom_call.1} parent=1 // pred_check
      _
    $region11: #{tpu_custom_call.1} parent=1 // pred_check_branch
      %42 = sbr.rel (0) target = $region13
    $region12: #{tpu_custom_call.1} parent=1 // pred_region
      %44 = vsyncadd [#allocation6], 0
      %s45 = sshll.u32 %s2, 4
      %s46 = int_to_ptr.hbm [resolvable:$true] %s45
      %s47 = sshll.u32 [#allocation7], 4
      %s48 = int_to_ptr.vmem [resolvable:$true] %s47
      %53 = dma.hbm_to_vmem [thread:$0]  %s46, 1024, %s48, [#allocation6], 64, 64, 4
    $region13: #{tpu_custom_call.1} parent=1 // pred_fallthru
      _
    // Predicated region
    $region14: #{tpu_custom_call.1} parent=1 // pred_check
      _
    $region15: #{tpu_custom_call.1} parent=1 // pred_check_branch
      %55 = sbr.rel (0) target = $region17
    $region16: #{tpu_custom_call.1} parent=1 // pred_region
      _
    $region17: #{tpu_custom_call.1} parent=1 // pred_fallthru
      _
    // Predicated region
    $region18: #{tpu_custom_call.1} parent=1 // pred_check
      _
    $region19: #{tpu_custom_call.1} parent=1 // pred_check_branch
      %57 = sbr.rel (0) target = $region21
    $region20: #{tpu_custom_call.1} parent=1 // pred_region
      %59 = vsyncadd [#allocation9], 0
      %s60 = sshll.u32 %s4, 4
      %s61 = int_to_ptr.hbm [resolvable:$true] %s60
      %s62 = sshll.u32 [#allocation8], 4
      %s63 = int_to_ptr.vmem [resolvable:$true] %s62
      %68 = dma.hbm_to_vmem [thread:$0]  %s61, 1024, %s63, [#allocation9], 64, 64, 4
    $region21: #{tpu_custom_call.1} parent=1 // pred_fallthru
      _
    // Predicated region
    $region22: #{tpu_custom_call.1} parent=1 // pred_check
      _
    $region23: #{tpu_custom_call.1} parent=1 // pred_check_branch
      %70 = sbr.rel (0) target = $region25
    $region24: #{tpu_custom_call.1} parent=1 // pred_region
      _
    $region25: #{tpu_custom_call.1} parent=1 // pred_fallthru
      _
    // Predicated region
    $region26: #{tpu_custom_call.1} parent=1 // pred_check
      _
    $region27: #{tpu_custom_call.1} parent=1 // pred_check_branch
      %72 = sbr.rel (0) target = $region29
    $region28: #{tpu_custom_call.1} parent=1 // pred_region
      %74 = dma.done [#allocation3], 128
    $region29: #{tpu_custom_call.1} parent=1 // pred_fallthru
      _
    // Predicated region
    $region30: #{tpu_custom_call.1} parent=1 // pred_check
      _
    $region31: #{tpu_custom_call.1} parent=1 // pred_check_branch
      %76 = sbr.rel (0) target = $region33
    $region32: #{tpu_custom_call.1} parent=1 // pred_region
      %78 = dma.done [#allocation6], 128
    $region33: #{tpu_custom_call.1} parent=1 // pred_fallthru
      _
    // Predicated region
    $region34: #{tpu_custom_call.1} parent=1 // pred_check
      _
    $region35: #{tpu_custom_call.1} parent=1 // pred_check_branch
      %80 = sbr.rel (0) target = $region37
    $region36: #{tpu_custom_call.1} parent=1 // pred_region
      %82 = dma.done [#allocation6], 1024
    $region37: #{tpu_custom_call.1} parent=1 // pred_fallthru
      _
    // Predicated region
    $region38: #{tpu_custom_call.1} parent=1 // pred_check
      _
    $region39: #{tpu_custom_call.1} parent=1 // pred_check_branch
      %84 = sbr.rel (0) target = $region41
    $region40: #{tpu_custom_call.1} parent=1 // pred_region
      %86 = dma.done [#allocation9], 1024
    $region41: #{tpu_custom_call.1} parent=1 // pred_fallthru
      _
    %v88 = vld [vmem:[#allocation5] sm:$0xf]
    %v89 = vld [vmem:[#allocation5 + $0x4] sm:$0xf]
    %v90 = vld [vmem:[#allocation2] sm:$0xf]
    %v91 = vld [vmem:[#allocation2 + $0x4] sm:$0xf]
    %v94 = vunpack.c.l.b16 %v88
    %v95 = vunpack.c.l.b16 %v89
    %v96 = vpack.c.b16 %v95, %v94
    %v99 = vunpack.c.l.b16 %v90
    %v100 = vunpack.c.l.b16 %v91
    %v101 = vpack.c.b16 %v100, %v99
    %vm103 = vcmask 130048
    %v105 = vsel %vm103, %v96, 0
    %107 = vmatpush.bf16.msra.mxu0 0
    %108 = vmatpush.bf16.msra.mxu0 0
    %109 = vmatpush.bf16.msra.mxu0 0
    %110 = vmatpush.bf16.msra.mxu0 0
    %111 = vmatpush.bf16.msra.mxu0 0
    %112 = vmatpush.bf16.msra.mxu0 0
    %113 = vmatpush.bf16.msra.mxu0 0
    %114 = vmatpush.bf16.msra.mxu0 %v101
    %115 = vmatmul.bf16.gmra.mxu0 %v105
    %v116 = vpop.f32.mrf.mxu0
    %v117 = vadd.f32 0.0, %v116
    %v118 = vpop.f32.mrf.mxu0
    %v119 = vadd.f32 0.0, %v118
    %120 = vdwg.mxu0
    %v121 = vpack.c.bf16 %v119, %v117
    %v122 = vld [vmem:[#allocation7] sm:$0xf]
    %v123 = vld [vmem:[#allocation7 + $0x4] sm:$0xf]
    %v124 = vld [vmem:[#allocation7 + $0x8] sm:$0xf]
    %v125 = vld [vmem:[#allocation7 + $0xc] sm:$0xf]
    %v126 = vld [vmem:[#allocation7 + $0x10] sm:$0xf]
    %v127 = vld [vmem:[#allocation7 + $0x14] sm:$0xf]
    %v128 = vld [vmem:[#allocation7 + $0x18] sm:$0xf]
    %v129 = vld [vmem:[#allocation7 + $0x1c] sm:$0xf]
    %v130 = vld [vmem:[#allocation7 + $0x20] sm:$0xf]
    %v131 = vld [vmem:[#allocation7 + $0x24] sm:$0xf]
    %v132 = vld [vmem:[#allocation7 + $0x28] sm:$0xf]
    %v133 = vld [vmem:[#allocation7 + $0x2c] sm:$0xf]
    %v134 = vld [vmem:[#allocation7 + $0x30] sm:$0xf]
    %v135 = vld [vmem:[#allocation7 + $0x34] sm:$0xf]
    %v136 = vld [vmem:[#allocation7 + $0x38] sm:$0xf]
    %v137 = vld [vmem:[#allocation7 + $0x3c] sm:$0xf]
    %v138 = vld [vmem:[%s3] sm:$0x1]
    %v140 = vperm.slane %v138, 0
    %v158 = vunpack.c.l.b16 %v122
    %v159 = vunpack.c.l.b16 %v123
    %v160 = vunpack.c.l.b16 %v124
    %v161 = vunpack.c.l.b16 %v125
    %v162 = vunpack.c.l.b16 %v126
    %v163 = vunpack.c.l.b16 %v127
    %v164 = vunpack.c.l.b16 %v128
    %v165 = vunpack.c.l.b16 %v129
    %v166 = vunpack.c.l.b16 %v130
    %v167 = vunpack.c.l.b16 %v131
    %v168 = vunpack.c.l.b16 %v132
    %v169 = vunpack.c.l.b16 %v133
    %v170 = vunpack.c.l.b16 %v134
    %v171 = vunpack.c.l.b16 %v135
    %v172 = vunpack.c.l.b16 %v136
    %v173 = vunpack.c.l.b16 %v137
    %v174 = vpack.c.b16 %v159, %v158
    %v175 = vpack.c.b16 %v161, %v160
    %v176 = vpack.c.b16 %v163, %v162
    %v177 = vpack.c.b16 %v165, %v164
    %v178 = vpack.c.b16 %v167, %v166
    %v179 = vpack.c.b16 %v169, %v168
    %v180 = vpack.c.b16 %v171, %v170
    %v181 = vpack.c.b16 %v173, %v172
    %190 = vmatpush.bf16.msra.mxu0 %v181
    %191 = vmatpush.bf16.msra.mxu0 %v180
    %192 = vmatpush.bf16.msra.mxu0 %v179
    %193 = vmatpush.bf16.msra.mxu0 %v178
    %194 = vmatpush.bf16.msra.mxu0 %v177
    %195 = vmatpush.bf16.msra.mxu0 %v176
    %196 = vmatpush.bf16.msra.mxu0 %v175
    %197 = vmatpush.bf16.msra.mxu0 %v174
    %198 = vmatmul.bf16.gmra.mxu0 %v121
    %v199 = vpop.f32.mrf.mxu0
    %v200 = vadd.f32 %v140, %v199
    %v201 = vpop.f32.mrf.mxu0
    %v202 = vadd.f32 %v140, %v201
    %203 = vdwg.mxu0
    %v204 = vmax.f32 %v200, 0.0
    %v205 = vmax.f32 %v202, 0.0
    %v206 = vpack.c.bf16 %v205, %v204
    %v207 = vld [vmem:[#allocation8] sm:$0xf]
    %v208 = vld [vmem:[#allocation8 + $0x4] sm:$0xf]
    %v209 = vld [vmem:[#allocation8 + $0x8] sm:$0xf]
    %v210 = vld [vmem:[#allocation8 + $0xc] sm:$0xf]
    %v211 = vld [vmem:[#allocation8 + $0x10] sm:$0xf]
    %v212 = vld [vmem:[#allocation8 + $0x14] sm:$0xf]
    %v213 = vld [vmem:[#allocation8 + $0x18] sm:$0xf]
    %v214 = vld [vmem:[#allocation8 + $0x1c] sm:$0xf]
    %v215 = vld [vmem:[#allocation8 + $0x20] sm:$0xf]
    %v216 = vld [vmem:[#allocation8 + $0x24] sm:$0xf]
    %v217 = vld [vmem:[#allocation8 + $0x28] sm:$0xf]
    %v218 = vld [vmem:[#allocation8 + $0x2c] sm:$0xf]
    %v219 = vld [vmem:[#allocation8 + $0x30] sm:$0xf]
    %v220 = vld [vmem:[#allocation8 + $0x34] sm:$0xf]
    %v221 = vld [vmem:[#allocation8 + $0x38] sm:$0xf]
    %v222 = vld [vmem:[#allocation8 + $0x3c] sm:$0xf]
    %v239 = vunpack.c.l.b16 %v207
    %v240 = vunpack.c.l.b16 %v208
    %v241 = vunpack.c.l.b16 %v209
    %v242 = vunpack.c.l.b16 %v210
    %v243 = vunpack.c.l.b16 %v211
    %v244 = vunpack.c.l.b16 %v212
    %v245 = vunpack.c.l.b16 %v213
    %v246 = vunpack.c.l.b16 %v214
    %v247 = vunpack.c.l.b16 %v215
    %v248 = vunpack.c.l.b16 %v216
    %v249 = vunpack.c.l.b16 %v217
    %v250 = vunpack.c.l.b16 %v218
    %v251 = vunpack.c.l.b16 %v219
    %v252 = vunpack.c.l.b16 %v220
    %v253 = vunpack.c.l.b16 %v221
    %v254 = vunpack.c.l.b16 %v222
    %v255 = vpack.c.b16 %v240, %v239
    %v256 = vpack.c.b16 %v242, %v241
    %v257 = vpack.c.b16 %v244, %v243
    %v258 = vpack.c.b16 %v246, %v245
    %v259 = vpack.c.b16 %v248, %v247
    %v260 = vpack.c.b16 %v250, %v249
    %v261 = vpack.c.b16 %v252, %v251
    %v262 = vpack.c.b16 %v254, %v253
    %271 = vmatpush.bf16.msra.mxu0 %v262
    %272 = vmatpush.bf16.msra.mxu0 %v261
    %273 = vmatpush.bf16.msra.mxu0 %v260
    %274 = vmatpush.bf16.msra.mxu0 %v259
    %275 = vmatpush.bf16.msra.mxu0 %v258
    %276 = vmatpush.bf16.msra.mxu0 %v257
    %277 = vmatpush.bf16.msra.mxu0 %v256
    %278 = vmatpush.bf16.msra.mxu0 %v255
    %279 = vmatmul.bf16.gmra.mxu0 %v206
    %v280 = vpop.f32.mrf.mxu0
    %v281 = vadd.f32 0.0, %v280
    %v282 = vpop.f32.mrf.mxu0
    %v283 = vadd.f32 0.0, %v282
    %284 = vdwg.mxu0
    %v285 = vpack.c.bf16 %v283, %v281
    %v286 = vld [vmem:[%s5] sm:$0x1]
    %v288 = vperm.slane %v286, 0
    %290 = vmatpush.bf16.msra.mxu0 0
    %291 = vmatpush.bf16.msra.mxu0 0
    %292 = vmatpush.bf16.msra.mxu0 0
    %293 = vmatpush.bf16.msra.mxu0 0
    %294 = vmatpush.bf16.msra.mxu0 0
    %295 = vmatpush.bf16.msra.mxu0 0
    %296 = vmatpush.bf16.msra.mxu0 0
    %297 = vmatpush.bf16.msra.mxu0 %v285
    %298 = vmatmul.bf16.gmra.mxu0 %v105
    %v299 = vpop.f32.mrf.mxu0
    %v300 = vadd.f32 %v288, %v299
    %v301 = vpop.f32.mrf.mxu0
    %v302 = vadd.f32 %v288, %v301
    %303 = vdwg.mxu0
    %304 = vst [vmem:[#allocation10] sm:$0xff] %v300
    %305 = vst [vmem:[#allocation10 + $0x8] sm:$0xff] %v302
    // Predicated region
    $region42: #{tpu_custom_call.1} parent=1 // pred_check
      _
    $region43: #{tpu_custom_call.1} parent=1 // pred_check_branch
      %307 = sbr.rel (0) target = $region45
    $region44: #{tpu_custom_call.1} parent=1 // pred_region
      %309 = vsyncadd [#allocation4], 0
      %s310 = sshll.u32 [#allocation10], 4
      %s311 = int_to_ptr.vmem [resolvable:$true] %s310
      %s312 = sshll.u32 %s6, 4
      %s313 = int_to_ptr.hbm [resolvable:$true] %s312
      %318 = dma.vmem_to_hbm [thread:$0]  %s311, 256, %s313, [#allocation4], 128, 128, 8
    $region45: #{tpu_custom_call.1} parent=1 // pred_fallthru
      _
    // Predicated region
    $region46: #{tpu_custom_call.1} parent=1 // pred_check
      _
    $region47: #{tpu_custom_call.1} parent=1 // pred_check_branch
      %320 = sbr.rel (0) target = $region49
    $region48: #{tpu_custom_call.1} parent=1 // pred_region
      %322 = dma.done [#allocation4], 256
    $region49: #{tpu_custom_call.1} parent=1 // pred_fallthru
      _
    %323 = vsyncpa [#allocation3], 1
    %324 = vsyncpa [#allocation6], 1
    %325 = vsyncpa [#allocation9], 1
    %326 = vsyncpa [#allocation4], 1

</llo_original>
